<compile_context>
chip_gen: v7x
topology: tpu7x:2x2x1
jax: 0.10.0
libtpu: 0.0.40
codegen_flags: <defaults>
</compile_context>

<pallas_src>
import jax
import jax.numpy as jnp
from jax.experimental import pallas as pl
from jax.experimental.pallas import tpu as pltpu


# ---------------------------------------------------------------------------
# Path 1: zero-copy alias (preferred).  Output HBM buffer aliases the input,
# so no data movement is required and the kernel body is intentionally empty.
# ---------------------------------------------------------------------------
def _identity_alias_kernel(x_hbm_ref, o_hbm_ref):
    del x_hbm_ref, o_hbm_ref  # nothing to do: output aliases input


def _identity_alias(x):
    return pl.pallas_call(
        _identity_alias_kernel,
        out_shape=jax.ShapeDtypeStruct(x.shape, x.dtype),
        in_specs=[pl.BlockSpec(memory_space=pl.ANY)],
        out_specs=pl.BlockSpec(memory_space=pl.ANY),
        input_output_aliases={0: 0},
    )(x)


# ---------------------------------------------------------------------------
# Path 2: tiled, software-pipelined streaming copy (used if the alias path is
# unavailable on the current build, or when a fresh buffer is required).
# ---------------------------------------------------------------------------
def _identity_copy_kernel(x_ref, o_ref):
    o_ref[...] = x_ref[...]


_LANE = 128
_BLOCK_BYTES = 4 * 1024 * 1024   # ~4 MiB per block; in+out, 2-deep => ~16 MiB VMEM
_VMEM_LIMIT = 32 * 1024 * 1024   # within v5e/v6e/v7x scoped-VMEM capability


def _sublane_multiple(dtype):
    # Minimum second-to-last tile dim: 8 (4-byte), 16 (2-byte), 32 (1-byte).
    itemsize = jnp.dtype(dtype).itemsize
    return max(8, 32 // max(1, itemsize))


def _choose_lane_dense_cols(total):
    # Widest lane-dense (multiple-of-128) last dim that divides the element
    # count: fewer, wider unmasked stores / DMA rows per tile.
    for cols in (8192, 4096, 2048, 1024, 512, 256, _LANE):
        if total % cols == 0:
            return cols
    return None


def _identity_copy(x):
    orig_shape = x.shape
    total = x.size
    itemsize = jnp.dtype(x.dtype).itemsize
    sub = _sublane_multiple(x.dtype)

    cols = _choose_lane_dense_cols(total)
    if cols is None:
        # Element count not a multiple of 128: keep the natural last dim
        # (a full-extent last dim is always a legal block) but STILL tile the
        # rows so the copy stays double-buffered instead of one giant block.
        cols = orig_shape[-1] if x.ndim >= 2 else total
    rows = total // cols

    x2d = x.reshape(rows, cols)  # contiguous reshape: no HBM traffic

    tm = max(1, _BLOCK_BYTES // max(1, cols * itemsize))
    tm = min(rows, tm)
    if tm < rows:
        tm = max(sub, (tm // sub) * sub)  # dtype-aware sublane alignment
        tm = min(rows, tm)

    grid = (pl.cdiv(rows, tm),)

    out2d = pl.pallas_call(
        _identity_copy_kernel,
        out_shape=jax.ShapeDtypeStruct((rows, cols), x2d.dtype),
        grid=grid,
        in_specs=[pl.BlockSpec((tm, cols), lambda i: (i, 0))],
        out_specs=pl.BlockSpec((tm, cols), lambda i: (i, 0)),
        compiler_params=pltpu.CompilerParams(
            dimension_semantics=("parallel",),  # megacore sharding on v7x
            vmem_limit_bytes=_VMEM_LIMIT,
        ),
        cost_estimate=pl.CostEstimate(
            flops=0, transcendentals=0, bytes_accessed=2 * total * itemsize
        ),
    )(x2d)

    return out2d.reshape(orig_shape)


# ---------------------------------------------------------------------------
# Public wrapper matching Identity.forward(self, x, *args, **kwargs) -> x.
# ---------------------------------------------------------------------------
_ALIAS_PATH_OK = True  # disabled after the first failure (feature detection)


def identity_pallas(x, *args, **kwargs):
    """Pallas implementation of imagen's Identity module: returns x unchanged."""
    del args, kwargs  # forward(self, x, *args, **kwargs) ignores the extras

    x = jnp.asarray(x)
    if x.size == 0 or x.ndim == 0:
        return x

    global _ALIAS_PATH_OK
    if _ALIAS_PATH_OK:
        try:
            return _identity_alias(x)
        except Exception:
            # Zero-copy alias path unavailable on this jax/libtpu build;
            # fall back to the tiled streaming copy.
            _ALIAS_PATH_OK = False
    return _identity_copy(x)


if __name__ == "__main__":
    key = jax.random.PRNGKey(0)
    N, C, H, W = 2, 4, 16, 16
    x = jax.random.normal(key, (N, C, H, W), dtype=jnp.float32)

    # Default (zero-copy alias) path; extra args/kwargs ignored like Identity.forward.
    out = identity_pallas(x, "unused_arg", unused_kw=123)
    out = jax.block_until_ready(out)
    assert out.shape == x.shape and out.dtype == x.dtype
    assert jnp.array_equal(out, x)

    # Explicitly exercise the streaming-copy path (lane-dense branch).
    out_copy = jax.block_until_ready(_identity_copy(x))
    assert jnp.array_equal(out_copy, x)

    # Element count not divisible by 128 exercises the fixed (tiled) fallback branch.
    y = jax.random.normal(jax.random.PRNGKey(1), (5, 3, 7, 9), dtype=jnp.float32)
    out_y = jax.block_until_ready(_identity_copy(y))
    assert jnp.array_equal(out_y, y)

    print("KERNEL_OK")
</pallas_src>

<mosaic_0001>
module attributes {stable_mosaic.version = 11 : i64} {
  func.func @_identity_alias_kernel(%arg0: memref<2x4x16x16xf32, #tpu.memory_space<any>>, %arg1: memref<2x4x16x16xf32, #tpu.memory_space<any>>) attributes {dimension_semantics = [], scalar_prefetch = 0 : i64, scratch_operands = 0 : i64, tpu.core_type = #tpu.core_type<tc>} {
    return
  }
}

module attributes {stable_mosaic.version = 11 : i64} {
  func.func @_identity_copy_kernel(%arg0: i32, %arg1: memref<1x2048xf32, #tpu.memory_space<vmem>>, %arg2: memref<1x2048xf32, #tpu.memory_space<vmem>>) attributes {dimension_semantics = [#tpu.dimension_semantics<parallel>], iteration_bounds = array<i64: 1>, scalar_prefetch = 0 : i64, scratch_operands = 0 : i64, tpu.core_type = #tpu.core_type<tc>, window_params = [{transform_indices = @transform_0, window_bounds = array<i64: 1, 2048>}, {transform_indices = @transform_1, window_bounds = array<i64: 1, 2048>}]} {
    %c0 = arith.constant 0 : index
    %c0_0 = arith.constant 0 : index
    %0 = vector.load %arg1[%c0, %c0_0] : memref<1x2048xf32, #tpu.memory_space<vmem>>, vector<1x2048xf32>
    %c0_1 = arith.constant 0 : index
    %c0_2 = arith.constant 0 : index
    %1 = vector.load %arg2[%c0_1, %c0_2] : memref<1x2048xf32, #tpu.memory_space<vmem>>, vector<1x2048xf32>
    tpu.vector_store %arg2[%c0_1, %c0_2], %0 {strides = array<i32>} : memref<1x2048xf32, #tpu.memory_space<vmem>>, vector<1x2048xf32>,
    return
  }
  func.func @transform_0(%arg0: i32) -> (i32, i32) {
    %c0_i32 = arith.constant 0 : i32
    %c0_i32_0 = arith.constant 0 : i32
    return %arg0, %c0_i32 : i32, i32
  }
  func.func @transform_1(%arg0: i32) -> (i32, i32) {
    %c0_i32 = arith.constant 0 : i32
    %c0_i32_0 = arith.constant 0 : i32
    return %arg0, %c0_i32 : i32, i32
  }
}

</mosaic_0001>

<llo_original>
// kernel: tpu_custom_call.1
$region0: #{tpu_custom_call.1}
  #allocation0 [shape = 'u32[]', space=smem, size = 0x4, offset = 0x4, fixed_abs, tag = 'smem constant byte address 0x4 - core index']
  #allocation1 [shape = 'u32[144,128]{1,0:T(1,128)}', space=vmem, size = 0x12000, scoped, tag = 'internal scratch']
  %s0 = inlined_call_operand.hbm [shape: f32[2,4,16,16], index: 0, kind: input, shape index: {}, may-alias: {0,1}]
  %s1 = inlined_call_operand.hbm [shape: f32[2,4,16,16], index: 1, kind: output, shape index: {}, may-alias: {0,1}]
  %s2 = sld [smem:[#allocation0]]
  $region2: #{tpu_custom_call.1} parent=0
    _
  %s4 = ssub.s32 1, %s2
  %s5 = scalar_select 0, %s4, %s2

// kernel: tpu_custom_call.1
$region0: #{tpu_custom_call.1}
  #allocation0 [shape = 'u32[]', space=smem, size = 0x4, offset = 0x4, fixed_abs, tag = 'smem constant byte address 0x4 - core index']
  #allocation1 [shape = 'u32[144,128]{1,0:T(1,128)}', space=vmem, size = 0x12000, scoped, tag = 'internal scratch']
  %s0 = inlined_call_operand.hbm [shape: f32[1,2048], index: 0, kind: input, shape index: {}]
  %s1 = inlined_call_operand.hbm [shape: f32[1,2048], index: 1, kind: output, shape index: {}]
  %s2 = sld [smem:[#allocation0]]
  $region18: #{tpu_custom_call.1} parent=0
    _
  %s4 = ssub.s32 1, %s2
  %s5 = scalar_select 0, %s4, %s2
  $region1: #{tpu_custom_call.1} parent=0
    #allocation2 [shape = 'u8[8192]{0}', space=vmem, size = 0x2000, scoped, tag = 'input window, operand 0, single buffered']
    #allocation3 [shape = 's32[1]{0}', space=sflag, size = 0x4, scoped, tag = 'scoped memory for tpu_custom_call.1']
    #allocation4 [shape = 's32[1]{0}', space=sflag, size = 0x4, scoped, tag = 'scoped memory for tpu_custom_call.1']
    #allocation5 [shape = 'u8[8192]{0}', space=vmem, size = 0x2000, scoped, tag = 'output window, operand 0, single buffered']
    %6 = vsyncpa [#allocation3], 0
    %7 = vsyncpa [#allocation4], 0
    // Predicated region
    $region2: #{tpu_custom_call.1} parent=1 // pred_check
      _
    $region3: #{tpu_custom_call.1} parent=1 // pred_check_branch
      %9 = sbr.rel (0) target = $region5
    $region4: #{tpu_custom_call.1} parent=1 // pred_region
      %s11 = ssub.s32 256, 256
      %12 = vsyncadd [#allocation3], %s11
      %s14 = sshll.u32 [#allocation2], 4
      %s15 = int_to_ptr.vmem [resolvable:$true] %s14
      %17 = dma.hbm_to_vmem [thread:$0]  %s0, 256, %s15, [#allocation3]
    $region5: #{tpu_custom_call.1} parent=1 // pred_fallthru
      _
    // Predicated region
    $region6: #{tpu_custom_call.1} parent=1 // pred_check
      _
    $region7: #{tpu_custom_call.1} parent=1 // pred_check_branch
      %19 = sbr.rel (0) target = $region9
    $region8: #{tpu_custom_call.1} parent=1 // pred_region
      %20 = dma.done [#allocation3], 256
    $region9: #{tpu_custom_call.1} parent=1 // pred_fallthru
      _
    %v21 = vld [vmem:[#allocation2] sm:$0xff]
    %v22 = vld [vmem:[#allocation2 + $0x8] sm:$0xff]
    %23 = vst [vmem:[#allocation5] sm:$0xff] %v21
    %24 = vst [vmem:[#allocation5 + $0x8] sm:$0xff] %v22
    // Predicated region
    $region10: #{tpu_custom_call.1} parent=1 // pred_check
      _
    $region11: #{tpu_custom_call.1} parent=1 // pred_check_branch
      %26 = sbr.rel (0) target = $region13
    $region12: #{tpu_custom_call.1} parent=1 // pred_region
      %s28 = ssub.s32 256, 256
      %29 = vsyncadd [#allocation4], %s28
      %s31 = sshll.u32 [#allocation5], 4
      %s32 = int_to_ptr.vmem [resolvable:$true] %s31
      %34 = dma.vmem_to_hbm [thread:$0]  %s32, 256, %s1, [#allocation4]
    $region13: #{tpu_custom_call.1} parent=1 // pred_fallthru
      _
    // Predicated region
    $region14: #{tpu_custom_call.1} parent=1 // pred_check
      _
    $region15: #{tpu_custom_call.1} parent=1 // pred_check_branch
      %36 = sbr.rel (0) target = $region17
    $region16: #{tpu_custom_call.1} parent=1 // pred_region
      %37 = dma.done [#allocation4], 256
    $region17: #{tpu_custom_call.1} parent=1 // pred_fallthru
      _
    %38 = vsyncpa [#allocation3], 1
    %39 = vsyncpa [#allocation4], 1

</llo_original>
